<compile_context>
chip_gen: v7x
topology: tpu7x:2x2x1
jax: 0.10.0
libtpu: 0.0.40
codegen_flags: <defaults>
</compile_context>

<pallas_src>
import itertools

import numpy as np
import jax
import jax.numpy as jnp
from jax import lax
from jax.experimental import pallas as pl
from jax.experimental.pallas import tpu as pltpu


# ----------------------------------------------------------------------------
# Parameter setup (plain numpy): fold the morphic scatter/gather into matrices.
# Reproduces the PyTorch code exactly, including the "stale dim" quirk where the
# reference `decard_idx` inside the target_idx loop uses the LAST axis size for
# both axes.
# ----------------------------------------------------------------------------
def _to_decard_idx(angle, size):
    a = np.arcsin(np.sin(angle))
    b = np.cos(angle)
    c = np.sqrt(1.0 - np.sin(angle) ** 2 + 1e-6)
    f = a * b / c
    f = 2.0 * f / np.pi
    f = (f + 1.0) / 2.0
    return f * (size - 1)


def _give_window(window_width, num_dim):
    rng = list(range(-window_width, window_width + 1))
    return list(itertools.product(*([rng] * num_dim)))


def _sigmoid(x):
    return 1.0 / (1.0 + np.exp(-x))


def _build_axon_matrix(rng, input_size, output_size, num_sinapse, ww):
    # out[b, p, q] += x[b, h, w] * W[s, h, w] * src[s, h, w, d]
    Hi, Wi = input_size
    Ho, Wo = output_size
    S = num_sinapse
    W = rng.uniform(-1.0, 1.0, size=(S, Hi, Wi))
    coord0 = rng.uniform(0.0, np.pi, size=(S, Hi, Wi))
    coord1 = rng.uniform(0.0, np.pi, size=(S, Hi, Wi))
    deltas = _give_window(ww, 2)

    # stale-dim quirk: reference decard uses output_size[-1] for BOTH axes
    dec0 = _to_decard_idx(coord0, Wo)
    dec1 = _to_decard_idx(coord1, Wo)

    src_rows = np.arange(Hi)[:, None] * Wi + np.arange(Wi)[None, :]
    src_rows = np.broadcast_to(src_rows[None], (S, Hi, Wi)).ravel()

    M = np.zeros((Hi * Wi, Ho * Wo), dtype=np.float64)
    for d0, d1 in deltas:
        i0 = np.rint(_to_decard_idx(coord0 + np.pi * d0 / (Ho - 1), Ho)).astype(np.int64)
        i1 = np.rint(_to_decard_idx(coord1 + np.pi * d1 / (Wo - 1), Wo)).astype(np.int64)
        dist = np.sqrt((i0 - dec0) ** 2 + (i1 - dec1) ** 2)
        src = _sigmoid(6.0 * (ww - 2.0 * dist) / ww)
        val = W * src
        np.add.at(M, (src_rows, (i0 * Wo + i1).ravel()), val.ravel())
    return M


def _build_dendrite_matrix(rng, input_size, output_size, num_sinapse, ww):
    # out[b, p, q] += x[b, j0, j1] * W[s, p, q] * src[s, p, q, d]
    Hi, Wi = input_size
    Ho, Wo = output_size
    S = num_sinapse
    W = rng.uniform(-1.0, 1.0, size=(S, Ho, Wo))
    coord0 = rng.uniform(0.0, np.pi, size=(S, Ho, Wo))
    coord1 = rng.uniform(0.0, np.pi, size=(S, Ho, Wo))
    deltas = _give_window(ww, 2)

    # stale-dim quirk: reference decard uses input_size[-1] for BOTH axes
    dec0 = _to_decard_idx(coord0, Wi)
    dec1 = _to_decard_idx(coord1, Wi)

    out_cols = np.arange(Ho)[:, None] * Wo + np.arange(Wo)[None, :]
    out_cols = np.broadcast_to(out_cols[None], (S, Ho, Wo)).ravel()

    M = np.zeros((Hi * Wi, Ho * Wo), dtype=np.float64)
    for d0, d1 in deltas:
        j0 = np.rint(_to_decard_idx(coord0 + np.pi * d0 / (Hi - 1), Hi)).astype(np.int64)
        j1 = np.rint(_to_decard_idx(coord1 + np.pi * d1 / (Wi - 1), Wi)).astype(np.int64)
        dist = np.sqrt((j0 - dec0) ** 2 + (j1 - dec1) ** 2)
        src = _sigmoid(6.0 * (ww - 2.0 * dist) / ww)
        val = W * src
        np.add.at(M, ((j0 * Wi + j1).ravel(), out_cols), val.ravel())
    return M


def build_morphic_matrix(rng, input_size, output_size, num_sinapse, ww):
    # Morphic_module: y = Dendrite(x) + Axon(x)  ->  x_flat @ (M_d + M_a)
    M = (_build_dendrite_matrix(rng, input_size, output_size, num_sinapse, ww)
         + _build_axon_matrix(rng, input_size, output_size, num_sinapse, ww))
    return M.astype(np.float32)


# ----------------------------------------------------------------------------
# Pallas kernel: stage-gridded network forward.
#   stage 0            : y = x @ M_in ; BN ; tanh ; store to act scratch
#   stage 1 .. L       : y = act @ M_l ; BN ; tanh ; store to act scratch
#   stage L + 1        : logits = act @ W_out + b_out  -> lane-dense output
# The (1, F, F) hidden-layer block is prefetched by the Pallas pipeline while
# the previous stage computes; constant-index blocks (x, M_in, W_out, b_out,
# output) are fetched once and stay VMEM-resident.
# ----------------------------------------------------------------------------
def _make_network_kernel(num_layers, eps=1e-5):
    last_stage = num_layers + 1

    def kernel(nrows_ref, x_ref, m0_ref, layer_ref, wout_ref, bout_ref,
               out_ref, act_ref):
        # nrows_ref: (1,)        i32 SMEM   real (un-padded) batch size
        # x_ref:     (Bp, Din)   bf16       rows >= b_real are zero padding
        # m0_ref:    (Din, F)    bf16       folded input Morphic_module
        # layer_ref: (1, F, F)   bf16       current hidden Morphic_module
        # wout_ref:  (F, Cp)     bf16       classifier, zero-padded to 128 lanes
        # bout_ref:  (1, Cp)     f32
        # out_ref:   (Bp, Cp)    f32
        # act_ref:   (Bp, F)     f32 VMEM   persistent activation carry
        s = pl.program_id(0)
        Bp, F = act_ref.shape

        b_real = nrows_ref[0]
        inv_n = 1.0 / (b_real.astype(jnp.float32) * jnp.float32(F))

        def bn_tanh_store(y):
            # BatchNorm2d(1, track_running_stats=False): batch stats over all
            # real N*H*W elements (single channel), gamma=1, beta=0.
            # Padded rows of `y` are exactly zero (zero LHS rows), so unmasked
            # sums over the padded batch equal sums over the real rows.
            # Fused reductions: sublane partials first, then ONE cross-lane
            # reduction over the stacked (2, F) slab; var = E[y^2] - mean^2.
            p1 = jnp.sum(y, axis=0, keepdims=True)           # (1, F)
            p2 = jnp.sum(y * y, axis=0, keepdims=True)       # (1, F)
            tot = jnp.sum(jnp.concatenate([p1, p2], axis=0),
                          axis=1, keepdims=True)             # (2, 1)
            mean = tot[0:1, :] * inv_n
            var = tot[1:2, :] * inv_n - mean * mean
            z = jnp.tanh((y - mean) * lax.rsqrt(var + eps))
            # Mask AFTER tanh (off the reduction critical path): padded rows of
            # the stored activation are exact zeros, so the next matmul keeps
            # the "zero padded rows" invariant without masking its inputs.
            row_ids = lax.broadcasted_iota(jnp.int32, (Bp, F), 0)
            mask = (row_ids < b_real).astype(jnp.float32)
            act_ref[...] = z * mask

        @pl.when(s == 0)
        def _():
            y = jnp.dot(x_ref[...], m0_ref[...],
                        preferred_element_type=jnp.float32)
            bn_tanh_store(y)

        @pl.when(jnp.logical_and(s > 0, s < last_stage))
        def _():
            y = jnp.dot(act_ref[...].astype(jnp.bfloat16), layer_ref[0],
                        preferred_element_type=jnp.float32)
            bn_tanh_store(y)

        @pl.when(s == last_stage)
        def _():
            logits = jnp.dot(act_ref[...].astype(jnp.bfloat16), wout_ref[...],
                             preferred_element_type=jnp.float32)
            out_ref[...] = (logits + bout_ref[...]).astype(out_ref.dtype)

    return kernel


def small_morphic_forward(x, m_in_bf, layers_bf, w_out_bf, b_out, num_classes):
    """x: (B, 1, H, W) float32 NCHW -> logits (B, num_classes) float32.

    m_in_bf:   (Hi*Wi, F) bf16   folded input Morphic_module operator
    layers_bf: (L, F, F)  bf16   stacked folded hidden Morphic_module operators
    w_out_bf:  (F, Cp)    bf16   classifier weight, zero-padded to Cp (>=128) lanes
    b_out:     (1, Cp)    f32    classifier bias, zero-padded to Cp lanes
    """
    B = x.shape[0]
    x_flat = x.reshape(B, -1).astype(jnp.float32)
    Din = x_flat.shape[1]
    F = m_in_bf.shape[1]
    Cp = w_out_bf.shape[1]
    num_layers = int(layers_bf.shape[0])
    assert num_layers >= 1, "kernel expects at least one hidden morphic layer"

    # Pad the batch to a multiple of 16: bf16 packs two rows per sublane, so
    # 16 rows fill packed (16, 128) MXU LHS tiles.  BN stats stay exact because
    # the padded rows are zero at every matmul input (see bn_tanh_store).
    Bp = max(16, ((B + 15) // 16) * 16)
    x_pad = jnp.pad(x_flat, ((0, Bp - B), (0, 0))).astype(jnp.bfloat16)

    # Real batch size as runtime SMEM data -> no recompile per batch size
    # (within the same Bp bucket).
    nrows = jnp.array([B], dtype=jnp.int32)

    kernel = _make_network_kernel(num_layers)
    n_stages = num_layers + 2

    # Hidden-layer operator index per stage: stage 0 primes layer 0 (needed at
    # stage 1); stages 1..L use layer s-1 (layer s is prefetched meanwhile);
    # the classifier stage repeats the last index (no extra DMA).
    def layer_index(s, nrows_ref):
        del nrows_ref
        return (jnp.maximum(jnp.minimum(s - 1, num_layers - 1), 0), 0, 0)

    grid_spec = pltpu.PrefetchScalarGridSpec(
        num_scalar_prefetch=1,
        grid=(n_stages,),
        in_specs=[
            pl.BlockSpec((Bp, Din), lambda s, nr: (0, 0)),
            pl.BlockSpec((Din, F), lambda s, nr: (0, 0)),
            pl.BlockSpec((1, F, F), layer_index),
            pl.BlockSpec((F, Cp), lambda s, nr: (0, 0)),
            pl.BlockSpec((1, Cp), lambda s, nr: (0, 0)),
        ],
        out_specs=pl.BlockSpec((Bp, Cp), lambda s, nr: (0, 0)),
        scratch_shapes=[pltpu.VMEM((Bp, F), jnp.float32)],
    )

    cost = pl.CostEstimate(
        flops=2 * Bp * (Din * F + num_layers * F * F + F * Cp),
        transcendentals=Bp * F * (num_layers + 1),
        bytes_accessed=(x_pad.size * 2 + m_in_bf.size * 2 + layers_bf.size * 2
                        + w_out_bf.size * 2 + b_out.size * 4 + Bp * Cp * 4),
    )

    out = pl.pallas_call(
        kernel,
        out_shape=jax.ShapeDtypeStruct((Bp, Cp), jnp.float32),
        grid_spec=grid_spec,
        compiler_params=pltpu.CompilerParams(
            dimension_semantics=("arbitrary",),      # stages are sequential
            vmem_limit_bytes=32 * 1024 * 1024,       # headroom for double buffers,
        ),                                           # safe on v5e/v6e/v7x
        cost_estimate=cost,
    )(nrows, x_pad, m_in_bf, layers_bf, w_out_bf, b_out)

    return out[:B, :num_classes]


# ----------------------------------------------------------------------------
# Plain numpy/f64 reference (same math, same bf16 quantization points as the
# kernel: bf16 parameters, activations rounded to bf16 right before each
# matmul) for a silent correctness check.
# ----------------------------------------------------------------------------
def _bf16_round64(a):
    a32 = jnp.asarray(np.asarray(a, dtype=np.float32))
    return np.asarray(a32.astype(jnp.bfloat16).astype(jnp.float32), dtype=np.float64)


def _reference_forward(x, m_in64, layers64, w_out64, b_out64, eps=1e-5):
    B = x.shape[0]

    def bn_tanh(y):
        mean = y.mean()
        var = ((y - mean) ** 2).mean()
        return np.tanh((y - mean) / np.sqrt(var + eps))

    y = _bf16_round64(x.reshape(B, -1)) @ m_in64
    y = bn_tanh(y)
    for m in layers64:
        y = bn_tanh(_bf16_round64(y) @ m)
    return _bf16_round64(y) @ w_out64 + b_out64


if __name__ == "__main__":
    # Small shapes consistent with SmallMorphicNetwork(input_size, num_classes,
    # num_sinapse, window_width, num_layers, feauters_size, sw)
    input_size = (16, 16)
    feauters_size = (16, 16)
    num_classes = 10
    num_sinapse = 3
    window_width = 1
    num_layers = 2
    B = 2

    # Deterministic parameter initialization (synthetic, not a checkpoint load).
    prng = np.random.default_rng(0)
    m_in = build_morphic_matrix(prng, input_size, feauters_size, num_sinapse, window_width)
    m_layers = [
        build_morphic_matrix(prng, feauters_size, feauters_size, num_sinapse, window_width)
        for _ in range(num_layers)
    ]
    F = feauters_size[0] * feauters_size[1]
    bound = 1.0 / np.sqrt(F)
    w_out = prng.uniform(-bound, bound, size=(F, num_classes)).astype(np.float32)  # Linear weight (pre-transposed)
    b_out = prng.uniform(-bound, bound, size=(1, num_classes)).astype(np.float32)  # Linear bias

    # Device-side parameters: bf16 operators, lane-dense (128-wide) classifier.
    Cp = 128
    w_out_pad = np.zeros((F, Cp), dtype=np.float32)
    w_out_pad[:, :num_classes] = w_out
    b_out_pad = np.zeros((1, Cp), dtype=np.float32)
    b_out_pad[:, :num_classes] = b_out

    m_in_bf = jnp.asarray(m_in, dtype=jnp.bfloat16)
    layers_bf = jnp.asarray(np.stack(m_layers, axis=0), dtype=jnp.bfloat16)
    w_out_bf = jnp.asarray(w_out_pad, dtype=jnp.bfloat16)
    b_out_j = jnp.asarray(b_out_pad)

    # Deterministic example input, NCHW like the PyTorch module expects.
    x = jax.random.normal(jax.random.PRNGKey(0), (B, 1) + input_size, dtype=jnp.float32)

    out = small_morphic_forward(x, m_in_bf, layers_bf, w_out_bf, b_out_j, num_classes)
    out = jax.block_until_ready(out)

    # f64 reference using the same bf16-quantized parameters / matmul inputs.
    m_in64 = np.asarray(m_in_bf.astype(jnp.float32), dtype=np.float64)
    layers64 = [np.asarray(layers_bf[l].astype(jnp.float32), dtype=np.float64)
                for l in range(num_layers)]
    w_out64 = np.asarray(w_out_bf.astype(jnp.float32), dtype=np.float64)[:, :num_classes]
    b_out64 = b_out_pad[:, :num_classes].astype(np.float64)
    ref = _reference_forward(np.asarray(x), m_in64, layers64, w_out64, b_out64)

    assert out.shape == (B, num_classes)
    assert np.allclose(np.asarray(out), ref, atol=5e-3, rtol=5e-3)
    print("KERNEL_OK")
</pallas_src>

<mosaic_0001>
module attributes {stable_mosaic.version = 11 : i64} {
  func.func @kernel(%arg0: i32, %arg1: memref<1xi32, #tpu.memory_space<smem>>, %arg2: memref<16x256xbf16, #tpu.memory_space<vmem>>, %arg3: memref<256x256xbf16, #tpu.memory_space<vmem>>, %arg4: memref<1x256x256xbf16, #tpu.memory_space<vmem>>, %arg5: memref<256x128xbf16, #tpu.memory_space<vmem>>, %arg6: memref<1x128xf32, #tpu.memory_space<vmem>>, %arg7: memref<16x128xf32, #tpu.memory_space<vmem>>, %arg8: memref<16x256xf32, #tpu.memory_space<vmem>>) attributes {dimension_semantics = [#tpu.dimension_semantics<arbitrary>], iteration_bounds = array<i64: 4>, scalar_prefetch = 1 : i64, scratch_operands = 1 : i64, tpu.core_type = #tpu.core_type<tc>, window_params = [{pipeline_mode = #tpu.pipeline_mode<synchronous>, transform_indices = @transform_0, window_bounds = array<i64: 16, 256>}, {pipeline_mode = #tpu.pipeline_mode<synchronous>, transform_indices = @transform_1, window_bounds = array<i64: 256, 256>}, {transform_indices = @transform_2, window_bounds = array<i64: 1, 256, 256>}, {pipeline_mode = #tpu.pipeline_mode<synchronous>, transform_indices = @transform_3, window_bounds = array<i64: 256, 128>}, {pipeline_mode = #tpu.pipeline_mode<synchronous>, transform_indices = @transform_4, window_bounds = array<i64: 1, 128>}, {pipeline_mode = #tpu.pipeline_mode<synchronous>, transform_indices = @transform_5, window_bounds = array<i64: 16, 128>}]} {
    %c0 = arith.constant 0 : index
    %0 = memref.load %arg1[%c0] : memref<1xi32, #tpu.memory_space<smem>>
    %1 = arith.sitofp %0 : i32 to f32
    %cst = arith.constant 2.560000e+02 : f32
    %2 = arith.mulf %1, %cst : f32
    %cst_0 = arith.constant 1.000000e+00 : f32
    %3 = arith.divf %cst_0, %2 : f32
    %c0_i32 = arith.constant 0 : i32
    %4 = arith.cmpi eq, %arg0, %c0_i32 : i32
    %5 = arith.extui %4 : i1 to i32
    %c0_i32_1 = arith.constant 0 : i32
    %6 = arith.cmpi ne, %5, %c0_i32_1 : i32
    scf.if %6 {
      %c0_6 = arith.constant 0 : index
      %c0_7 = arith.constant 0 : index
      %15 = vector.load %arg2[%c0_6, %c0_7] : memref<16x256xbf16, #tpu.memory_space<vmem>>, vector<16x256xbf16>
      %c0_8 = arith.constant 0 : index
      %c0_9 = arith.constant 0 : index
      %16 = vector.load %arg3[%c0_8, %c0_9] : memref<256x256xbf16, #tpu.memory_space<vmem>>, vector<256x256xbf16>
      %cst_10 = arith.constant dense<0.000000e+00> : vector<16x256xf32>
      %17 = tpu.matmul %15, %16, %cst_10 {dimension_numbers = #tpu.dot_dimension_numbers<[1], [0], [0], [1], [0, 0, 1, 1], [], []>} : vector<16x256xbf16>, vector<256x256xbf16>, vector<16x256xf32> -> vector<16x256xf32>
      %cst_11 = arith.constant dense<0.000000e+00> : vector<256xf32>
      %18 = vector.multi_reduction <add>, %17, %cst_11 [0] : vector<16x256xf32> to vector<256xf32>
      %19 = vector.shape_cast %18 : vector<256xf32> to vector<1x256xf32>
      %20 = arith.mulf %17, %17 : vector<16x256xf32>
      %cst_12 = arith.constant dense<0.000000e+00> : vector<256xf32>
      %21 = vector.multi_reduction <add>, %20, %cst_12 [0] : vector<16x256xf32> to vector<256xf32>
      %22 = vector.shape_cast %21 : vector<256xf32> to vector<1x256xf32>
      %23 = tpu.concatenate %19, %22 in 0 : vector<1x256xf32>, vector<1x256xf32> -> vector<2x256xf32>
      %cst_13 = arith.constant dense<0.000000e+00> : vector<2xf32>
      %24 = vector.multi_reduction <add>, %23, %cst_13 [1] : vector<2x256xf32> to vector<2xf32>
      %25 = vector.shape_cast %24 : vector<2xf32> to vector<2x1xf32>
      %26 = vector.extract_strided_slice %25 {offsets = [0, 0], sizes = [1, 1], strides = [1, 1]} : vector<2x1xf32> to vector<1x1xf32>
      %27 = vector.broadcast %3 : f32 to vector<1x1xf32>
      %28 = arith.mulf %26, %27 : vector<1x1xf32>
      %29 = vector.extract_strided_slice %25 {offsets = [1, 0], sizes = [1, 1], strides = [1, 1]} : vector<2x1xf32> to vector<1x1xf32>
      %30 = vector.broadcast %3 : f32 to vector<1x1xf32>
      %31 = arith.mulf %29, %30 : vector<1x1xf32>
      %32 = arith.mulf %28, %28 : vector<1x1xf32>
      %33 = arith.subf %31, %32 : vector<1x1xf32>
      %34 = vector.broadcast %28 : vector<1x1xf32> to vector<16x256xf32>
      %35 = arith.subf %17, %34 : vector<16x256xf32>
      %cst_14 = arith.constant 9.99999974E-6 : f32
      %36 = vector.broadcast %cst_14 : f32 to vector<1x1xf32>
      %37 = arith.addf %33, %36 : vector<1x1xf32>
      %38 = math.rsqrt %37 : vector<1x1xf32>
      %39 = vector.broadcast %38 : vector<1x1xf32> to vector<16x256xf32>
      %40 = arith.mulf %35, %39 : vector<16x256xf32>
      %41 = math.tanh %40 : vector<16x256xf32>
      %42 = tpu.iota {dimensions = array<i32: 0>} : vector<16x256xi32>
      %43 = vector.broadcast %0 : i32 to vector<16x256xi32>
      %44 = arith.cmpi slt, %42, %43 : vector<16x256xi32>
      %45 = arith.extui %44 : vector<16x256xi1> to vector<16x256xi32>
      %46 = arith.sitofp %45 : vector<16x256xi32> to vector<16x256xf32>
      %47 = arith.mulf %41, %46 : vector<16x256xf32>
      %c0_15 = arith.constant 0 : index
      %c0_16 = arith.constant 0 : index
      %48 = vector.load %arg8[%c0_15, %c0_16] : memref<16x256xf32, #tpu.memory_space<vmem>>, vector<16x256xf32>
      tpu.vector_store %arg8[%c0_15, %c0_16], %47 {strides = array<i32>} : memref<16x256xf32, #tpu.memory_space<vmem>>, vector<16x256xf32>,
    } else {
    }
    %c0_i32_2 = arith.constant 0 : i32
    %7 = arith.cmpi sgt, %arg0, %c0_i32_2 : i32
    %c3_i32 = arith.constant 3 : i32
    %8 = arith.cmpi slt, %arg0, %c3_i32 : i32
    %9 = arith.andi %7, %8 : i1
    %10 = arith.extui %9 : i1 to i32
    %c0_i32_3 = arith.constant 0 : i32
    %11 = arith.cmpi ne, %10, %c0_i32_3 : i32
    scf.if %11 {
      %c0_6 = arith.constant 0 : index
      %c0_7 = arith.constant 0 : index
      %15 = vector.load %arg8[%c0_6, %c0_7] : memref<16x256xf32, #tpu.memory_space<vmem>>, vector<16x256xf32>
      %16 = arith.truncf %15 : vector<16x256xf32> to vector<16x256xbf16>
      %c0_8 = arith.constant 0 : index
      %c0_9 = arith.constant 0 : index
      %c0_10 = arith.constant 0 : index
      %17 = vector.load %arg4[%c0_8, %c0_9, %c0_10] : memref<1x256x256xbf16, #tpu.memory_space<vmem>>, vector<1x256x256xbf16>
      %18 = vector.shape_cast %17 : vector<1x256x256xbf16> to vector<256x256xbf16>
      %cst_11 = arith.constant dense<0.000000e+00> : vector<16x256xf32>
      %19 = tpu.matmul %16, %18, %cst_11 {dimension_numbers = #tpu.dot_dimension_numbers<[1], [0], [0], [1], [0, 0, 1, 1], [], []>} : vector<16x256xbf16>, vector<256x256xbf16>, vector<16x256xf32> -> vector<16x256xf32>
      %cst_12 = arith.constant dense<0.000000e+00> : vector<256xf32>
      %20 = vector.multi_reduction <add>, %19, %cst_12 [0] : vector<16x256xf32> to vector<256xf32>
      %21 = vector.shape_cast %20 : vector<256xf32> to vector<1x256xf32>
      %22 = arith.mulf %19, %19 : vector<16x256xf32>
      %cst_13 = arith.constant dense<0.000000e+00> : vector<256xf32>
      %23 = vector.multi_reduction <add>, %22, %cst_13 [0] : vector<16x256xf32> to vector<256xf32>
      %24 = vector.shape_cast %23 : vector<256xf32> to vector<1x256xf32>
      %25 = tpu.concatenate %21, %24 in 0 : vector<1x256xf32>, vector<1x256xf32> -> vector<2x256xf32>
      %cst_14 = arith.constant dense<0.000000e+00> : vector<2xf32>
      %26 = vector.multi_reduction <add>, %25, %cst_14 [1] : vector<2x256xf32> to vector<2xf32>
      %27 = vector.shape_cast %26 : vector<2xf32> to vector<2x1xf32>
      %28 = vector.extract_strided_slice %27 {offsets = [0, 0], sizes = [1, 1], strides = [1, 1]} : vector<2x1xf32> to vector<1x1xf32>
      %29 = vector.broadcast %3 : f32 to vector<1x1xf32>
      %30 = arith.mulf %28, %29 : vector<1x1xf32>
      %31 = vector.extract_strided_slice %27 {offsets = [1, 0], sizes = [1, 1], strides = [1, 1]} : vector<2x1xf32> to vector<1x1xf32>
      %32 = vector.broadcast %3 : f32 to vector<1x1xf32>
      %33 = arith.mulf %31, %32 : vector<1x1xf32>
      %34 = arith.mulf %30, %30 : vector<1x1xf32>
      %35 = arith.subf %33, %34 : vector<1x1xf32>
      %36 = vector.broadcast %30 : vector<1x1xf32> to vector<16x256xf32>
      %37 = arith.subf %19, %36 : vector<16x256xf32>
      %cst_15 = arith.constant 9.99999974E-6 : f32
      %38 = vector.broadcast %cst_15 : f32 to vector<1x1xf32>
      %39 = arith.addf %35, %38 : vector<1x1xf32>
      %40 = math.rsqrt %39 : vector<1x1xf32>
      %41 = vector.broadcast %40 : vector<1x1xf32> to vector<16x256xf32>
      %42 = arith.mulf %37, %41 : vector<16x256xf32>
      %43 = math.tanh %42 : vector<16x256xf32>
      %44 = tpu.iota {dimensions = array<i32: 0>} : vector<16x256xi32>
      %45 = vector.broadcast %0 : i32 to vector<16x256xi32>
      %46 = arith.cmpi slt, %44, %45 : vector<16x256xi32>
      %47 = arith.extui %46 : vector<16x256xi1> to vector<16x256xi32>
      %48 = arith.sitofp %47 : vector<16x256xi32> to vector<16x256xf32>
      %49 = arith.mulf %43, %48 : vector<16x256xf32>
      %c0_16 = arith.constant 0 : index
      %c0_17 = arith.constant 0 : index
      %50 = vector.load %arg8[%c0_16, %c0_17] : memref<16x256xf32, #tpu.memory_space<vmem>>, vector<16x256xf32>
      tpu.vector_store %arg8[%c0_16, %c0_17], %49 {strides = array<i32>} : memref<16x256xf32, #tpu.memory_space<vmem>>, vector<16x256xf32>,
    } else {
    }
    %c3_i32_4 = arith.constant 3 : i32
    %12 = arith.cmpi eq, %arg0, %c3_i32_4 : i32
    %13 = arith.extui %12 : i1 to i32
    %c0_i32_5 = arith.constant 0 : i32
    %14 = arith.cmpi ne, %13, %c0_i32_5 : i32
    scf.if %14 {
      %c0_6 = arith.constant 0 : index
      %c0_7 = arith.constant 0 : index
      %15 = vector.load %arg8[%c0_6, %c0_7] : memref<16x256xf32, #tpu.memory_space<vmem>>, vector<16x256xf32>
      %16 = arith.truncf %15 : vector<16x256xf32> to vector<16x256xbf16>
      %c0_8 = arith.constant 0 : index
      %c0_9 = arith.constant 0 : index
      %17 = vector.load %arg5[%c0_8, %c0_9] : memref<256x128xbf16, #tpu.memory_space<vmem>>, vector<256x128xbf16>
      %cst_10 = arith.constant dense<0.000000e+00> : vector<16x128xf32>
      %18 = tpu.matmul %16, %17, %cst_10 {dimension_numbers = #tpu.dot_dimension_numbers<[1], [0], [0], [1], [0, 0, 1, 1], [], []>} : vector<16x256xbf16>, vector<256x128xbf16>, vector<16x128xf32> -> vector<16x128xf32>
      %c0_11 = arith.constant 0 : index
      %c0_12 = arith.constant 0 : index
      %19 = vector.load %arg6[%c0_11, %c0_12] : memref<1x128xf32, #tpu.memory_space<vmem>>, vector<1x128xf32>
      %20 = vector.broadcast %19 : vector<1x128xf32> to vector<16x128xf32>
      %21 = arith.addf %18, %20 : vector<16x128xf32>
      %c0_13 = arith.constant 0 : index
      %c0_14 = arith.constant 0 : index
      %22 = vector.load %arg7[%c0_13, %c0_14] : memref<16x128xf32, #tpu.memory_space<vmem>>, vector<16x128xf32>
      tpu.vector_store %arg7[%c0_13, %c0_14], %21 {strides = array<i32>} : memref<16x128xf32, #tpu.memory_space<vmem>>, vector<16x128xf32>,
    } else {
    }
    return
  }
  func.func @transform_0(%arg0: i32, %arg1: memref<1xi32, #tpu.memory_space<smem>>) -> (i32, i32) {
    %c0_i32 = arith.constant 0 : i32
    %c0_i32_0 = arith.constant 0 : i32
    %c0_i32_1 = arith.constant 0 : i32
    return %c0_i32, %c0_i32_0 : i32, i32
  }
  func.func @transform_1(%arg0: i32, %arg1: memref<1xi32, #tpu.memory_space<smem>>) -> (i32, i32) {
    %c0_i32 = arith.constant 0 : i32
    %c0_i32_0 = arith.constant 0 : i32
    %c0_i32_1 = arith.constant 0 : i32
    return %c0_i32, %c0_i32_0 : i32, i32
  }
  func.func @transform_2(%arg0: i32, %arg1: memref<1xi32, #tpu.memory_space<smem>>) -> (i32, i32, i32) {
    %c1_i32 = arith.constant 1 : i32
    %0 = arith.subi %arg0, %c1_i32 : i32
    %c1_i32_0 = arith.constant 1 : i32
    %1 = arith.minsi %0, %c1_i32_0 : i32
    %c0_i32 = arith.constant 0 : i32
    %2 = arith.maxsi %1, %c0_i32 : i32
    %c0_i32_1 = arith.constant 0 : i32
    %c0_i32_2 = arith.constant 0 : i32
    %c0_i32_3 = arith.constant 0 : i32
    return %2, %c0_i32_1, %c0_i32_2 : i32, i32, i32
  }
  func.func @transform_3(%arg0: i32, %arg1: memref<1xi32, #tpu.memory_space<smem>>) -> (i32, i32) {
    %c0_i32 = arith.constant 0 : i32
    %c0_i32_0 = arith.constant 0 : i32
    %c0_i32_1 = arith.constant 0 : i32
    return %c0_i32, %c0_i32_0 : i32, i32
  }
  func.func @transform_4(%arg0: i32, %arg1: memref<1xi32, #tpu.memory_space<smem>>) -> (i32, i32) {
    %c0_i32 = arith.constant 0 : i32
    %c0_i32_0 = arith.constant 0 : i32
    %c0_i32_1 = arith.constant 0 : i32
    return %c0_i32, %c0_i32_0 : i32, i32
  }
  func.func @transform_5(%arg0: i32, %arg1: memref<1xi32, #tpu.memory_space<smem>>) -> (i32, i32) {
    %c0_i32 = arith.constant 0 : i32
    %c0_i32_0 = arith.constant 0 : i32
    %c0_i32_1 = arith.constant 0 : i32
    return %c0_i32, %c0_i32_0 : i32, i32
  }
}

</mosaic_0001>

<llo_original>
// kernel: tpu_custom_call.1
$region0: #{tpu_custom_call.1}
  #allocation0 [shape = 'u32[]', space=smem, size = 0x4, offset = 0x4, fixed_abs, tag = 'smem constant byte address 0x4 - core index']
  #allocation1 [shape = 'u32[144,128]{1,0:T(1,128)}', space=vmem, size = 0x12000, scoped, tag = 'internal scratch']
  #allocation2 [shape = 'f32[16,256]{1,0:T(8,128)}', space=vmem, size = 0x4000, scoped, tag = 'scratch operand']
  #allocation3 [shape = 's32[1]{0}', space=sflag, size = 0x4, scoped, tag = 'scoped memory for tpu_custom_call.1']
  #allocation4 [shape = 's32[1]{0:T(128)S(6)}', space=smem, size = 0x200, scoped, tag = 'prefetched SMEM operand 0']
  %s0 = inlined_call_operand.<no memory space> [shape: s32[1], index: 0, kind: input, shape index: {}]
  %s1 = inlined_call_operand.hbm [shape: bf16[16,256], index: 1, kind: input, shape index: {}]
  %s2 = inlined_call_operand.hbm [shape: bf16[256,256], index: 2, kind: input, shape index: {}]
  %s3 = inlined_call_operand.hbm [shape: bf16[2,256,256], index: 3, kind: input, shape index: {}]
  %s4 = inlined_call_operand.hbm [shape: bf16[256,128], index: 4, kind: input, shape index: {}]
  %s5 = inlined_call_operand.vmem [shape: f32[1,128], index: 5, kind: input, shape index: {}]
  %s6 = inlined_call_operand.hbm [shape: f32[16,128], index: 6, kind: output, shape index: {}]
  %s7 = sld [smem:[#allocation0]]
  $region81: #{tpu_custom_call.1} parent=0
    _
  %s9 = ssub.s32 1, %s7
  %s10 = scalar_select 0, %s9, %s7
  %11 = sst [smem:[#allocation4]] %s0
  $region1: #{tpu_custom_call.1} parent=0
    #allocation5 [shape = 'u8[8192]{0}', space=vmem, size = 0x2000, scoped, tag = 'input window, operand 1, single buffered']
    #allocation6 [shape = 's32[2]{0}', space=sflag, size = 0x8, scoped, tag = 'scoped memory for tpu_custom_call.1']
    #allocation7 [shape = 's32[2]{0}', space=sflag, size = 0x8, scoped, tag = 'scoped memory for tpu_custom_call.1']
    #allocation8 [shape = 'u8[131072]{0}', space=vmem, size = 0x20000, scoped, tag = 'input window, operand 2, single buffered']
    #allocation9 [shape = 's32[1]{0}', space=sflag, size = 0x4, scoped, tag = 'scoped memory for tpu_custom_call.1']
    #allocation10 [shape = 'u8[262144]{0}', space=vmem, size = 0x40000, scoped, tag = 'input window, operand 3']
    #allocation11 [shape = 'u8[65536]{0}', space=vmem, size = 0x10000, scoped, tag = 'input window, operand 4, single buffered']
    #allocation12 [shape = 'u8[8192]{0}', space=vmem, size = 0x2000, scoped, tag = 'output window, operand 0, single buffered']
    %12 = vsyncpa [#allocation6], 0
    %13 = vsyncpa [#allocation9], 0
    %14 = vsyncpa [#allocation7], 0
    loop: start=0, step=1, limit=6
    $region2: #{tpu_custom_call.1} parent=1 // loop_pre_header
      _
    $region3: #{tpu_custom_call.1} parent=1 // loop_header
      %s16 = sphi 0, %s20
      %p17 = scmp.ge.s32.totalorder %s16, 6
      %s24 = sphi 0, %s24
      %s26 = sphi 0, %s24
      %s27 = sphi 0, %s26
      %s41 = sphi 0, %s27
      %s45 = sphi 0, %s45
      %s47 = sphi 0, %s45
      %s48 = sphi 0, %s47
      %s62 = sphi 0, %s48
      %s78 = sphi 0, %s80
      %s81 = sphi 0, %s78
      %s82 = sphi 0, %s81
      %s98 = sphi 0, %s82
      %s102 = sphi 0, %s102
      %s104 = sphi 0, %s102
      %s105 = sphi 0, %s104
      %s119 = sphi 0, %s105
      %s123 = sphi 0, %s123
      %s125 = sphi 0, %s123
      %s126 = sphi 0, %s125
      %s140 = sphi 0, %s126
      %s144 = sphi 0, %s144
      %s146 = sphi 0, %s144
      %s147 = sphi 0, %s146
      %s161 = sphi 0, %s147
    $region4: #{tpu_custom_call.1} parent=1 // loop_header_branch
      %19 = sbr.rel (%p17) target = $region8
    $region5: #{tpu_custom_call.1} parent=1 // loop_body
      %s21 = ssub.s32 %s16, 1
      %s22 = ssub.s32 %s16, 2
      %s23 = sadd.s32 %s16, 1
      %s25 = sadd.s32 %s24, 1
      %p28 = scmp.eq.s32.totalorder %s16, 3
      %p29 = scmp.ne.s32.totalorder %s24, %s26
      %p30 = scmp.eq.s32.totalorder %s16, 0
      %p31 = por %p29, %p30
      %p32 = scmp.ne.s32.totalorder %s24, %s26
      %p33 = scmp.eq.s32.totalorder %s21, 3
      %p34 = por %p32, %p33
      %p35 = scmp.ne.s32.totalorder %s26, %s27
      %p36 = scmp.eq.s32.totalorder %s21, 0
      %p37 = por %p35, %p36
      %p38 = scmp.ne.s32.totalorder %s26, %s27
      %p39 = scmp.eq.s32.totalorder %s22, 3
      %p40 = por %p38, %p39
      %p42 = scmp.ne.s32.totalorder %s27, %s41
      %p43 = scmp.eq.s32.totalorder %s22, 0
      %p44 = por %p42, %p43
      %s46 = sadd.s32 %s45, 1
      %p49 = scmp.eq.s32.totalorder %s16, 3
      %p50 = scmp.ne.s32.totalorder %s45, %s47
      %p51 = scmp.eq.s32.totalorder %s16, 0
      %p52 = por %p50, %p51
      %p53 = scmp.ne.s32.totalorder %s45, %s47
      %p54 = scmp.eq.s32.totalorder %s21, 3
      %p55 = por %p53, %p54
      %p56 = scmp.ne.s32.totalorder %s47, %s48
      %p57 = scmp.eq.s32.totalorder %s21, 0
      %p58 = por %p56, %p57
      %p59 = scmp.ne.s32.totalorder %s47, %s48
      %p60 = scmp.eq.s32.totalorder %s22, 3
      %p61 = por %p59, %p60
      %p63 = scmp.ne.s32.totalorder %s48, %s62
      %p64 = scmp.eq.s32.totalorder %s22, 0
      %p65 = por %p63, %p64
      %s66 = ssub.s32 %s16, 1
      %p67 = scmp.lt.s32.totalorder %s66, 1
      %s68 = scalar_select %p67, %s66, 1
      %p69 = scmp.gt.s32.totalorder %s68, 0
      %s70 = scalar_select %p69, %s68, 0
      %s71 = ssub.s32 %s23, 1
      %p72 = scmp.lt.s32.totalorder %s71, 1
      %s73 = scalar_select %p72, %s71, 1
      %p74 = scmp.gt.s32.totalorder %s73, 0
      %s75 = scalar_select %p74, %s73, 0
      %s76 = ssub.s32 %s70, %s75
      %p77 = scmp.eq.s32.totalorder %s76, 0
      %s79 = sadd.s32 %s78, 1
      %s80 = scalar_select %p77, %s78, %s79
      %p83 = pneg %p77
      %p84 = scmp.eq.s32.totalorder %s16, 3
      %p85 = por %p83, %p84
      %p86 = scmp.ne.s32.totalorder %s78, %s81
      %p87 = scmp.eq.s32.totalorder %s16, 0
      %p88 = por %p86, %p87
      %p89 = scmp.ne.s32.totalorder %s78, %s81
      %p90 = scmp.eq.s32.totalorder %s21, 3
      %p91 = por %p89, %p90
      %p92 = scmp.ne.s32.totalorder %s81, %s82
      %p93 = scmp.eq.s32.totalorder %s21, 0
      %p94 = por %p92, %p93
      %p95 = scmp.ne.s32.totalorder %s81, %s82
      %p96 = scmp.eq.s32.totalorder %s22, 3
      %p97 = por %p95, %p96
      %p99 = scmp.ne.s32.totalorder %s82, %s98
      %p100 = scmp.eq.s32.totalorder %s22, 0
      %p101 = por %p99, %p100
      %s103 = sadd.s32 %s102, 1
      %p106 = scmp.eq.s32.totalorder %s16, 3
      %p107 = scmp.ne.s32.totalorder %s102, %s104
      %p108 = scmp.eq.s32.totalorder %s16, 0
      %p109 = por %p107, %p108
      %p110 = scmp.ne.s32.totalorder %s102, %s104
      %p111 = scmp.eq.s32.totalorder %s21, 3
      %p112 = por %p110, %p111
      %p113 = scmp.ne.s32.totalorder %s104, %s105
      %p114 = scmp.eq.s32.totalorder %s21, 0
      %p115 = por %p113, %p114
      %p116 = scmp.ne.s32.totalorder %s104, %s105
      %p117 = scmp.eq.s32.totalorder %s22, 3
      %p118 = por %p116, %p117
      %p120 = scmp.ne.s32.totalorder %s105, %s119
      %p121 = scmp.eq.s32.totalorder %s22, 0
      %p122 = por %p120, %p121
      %s124 = sadd.s32 %s123, 1
      %p127 = scmp.eq.s32.totalorder %s16, 3
      %p128 = scmp.ne.s32.totalorder %s123, %s125
      %p129 = scmp.eq.s32.totalorder %s16, 0
      %p130 = por %p128, %p129
      %p131 = scmp.ne.s32.totalorder %s123, %s125
      %p132 = scmp.eq.s32.totalorder %s21, 3
      %p133 = por %p131, %p132
      %p134 = scmp.ne.s32.totalorder %s125, %s126
      %p135 = scmp.eq.s32.totalorder %s21, 0
      %p136 = por %p134, %p135
      %p137 = scmp.ne.s32.totalorder %s125, %s126
      %p138 = scmp.eq.s32.totalorder %s22, 3
      %p139 = por %p137, %p138
      %p141 = scmp.ne.s32.totalorder %s126, %s140
      %p142 = scmp.eq.s32.totalorder %s22, 0
      %p143 = por %p141, %p142
      %s145 = sadd.s32 %s144, 1
      %p148 = scmp.eq.s32.totalorder %s16, 3
      %p149 = scmp.ne.s32.totalorder %s144, %s146
      %p150 = scmp.eq.s32.totalorder %s16, 0
      %p151 = por %p149, %p150
      %p152 = scmp.ne.s32.totalorder %s144, %s146
      %p153 = scmp.eq.s32.totalorder %s21, 3
      %p154 = por %p152, %p153
      %p155 = scmp.ne.s32.totalorder %s146, %s147
      %p156 = scmp.eq.s32.totalorder %s21, 0
      %p157 = por %p155, %p156
      %p158 = scmp.ne.s32.totalorder %s146, %s147
      %p159 = scmp.eq.s32.totalorder %s22, 3
      %p160 = por %p158, %p159
      %p162 = scmp.ne.s32.totalorder %s147, %s161
      %p163 = scmp.eq.s32.totalorder %s22, 0
      %p164 = por %p162, %p163
      %p165 = scmp.le.s32.totalorder 1, %s16
      %p166 = scmp.lt.s32.totalorder %s16, 5
      %p167 = pnand %p165, %p166
      %p168 = pneg %p167
      // Predicated region
      $region9: #{tpu_custom_call.1} parent=5 // pred_check
        _
      $region10: #{tpu_custom_call.1} parent=5 // pred_check_branch
        %170 = sbr.rel (%p167) target = $region12
      $region11: #{tpu_custom_call.1} parent=5 // pred_region
        %s171 = ssub.s32 %s16, 1
        // Predicated region
        $region13: #{tpu_custom_call.1} parent=11 // pred_check
          %p172 = pneg %p37
        $region14: #{tpu_custom_call.1} parent=11 // pred_check_branch
          %174 = sbr.rel (%p172) target = $region16
        $region15: #{tpu_custom_call.1} parent=11 // pred_region
          %s176 = ssub.s32 256, 256
          %177 = vsyncadd [#allocation6], %s176
          %s178 = sshll.u32 [#allocation5], 4
          %s179 = int_to_ptr.vmem [resolvable:$true] %s178
          %184 = dma.hbm_to_vmem [thread:$0]  %s1, 256, %s179, [#allocation6], 128, 128, 8
        $region16: #{tpu_custom_call.1} parent=11 // pred_fallthru
          _
        // Predicated region
        $region17: #{tpu_custom_call.1} parent=11 // pred_check
          %p185 = pneg %p58
        $region18: #{tpu_custom_call.1} parent=11 // pred_check_branch
          %187 = sbr.rel (%p185) target = $region20
        $region19: #{tpu_custom_call.1} parent=11 // pred_region
          %s189 = ssub.s32 4096, 4096
          %190 = vsyncadd [#allocation9], %s189
          %s191 = sshll.u32 [#allocation8], 4
          %s192 = int_to_ptr.vmem [resolvable:$true] %s191
          %197 = dma.hbm_to_vmem [thread:$0]  %s2, 4096, %s192, [#allocation9], 128, 128, 8
        $region20: #{tpu_custom_call.1} parent=11 // pred_fallthru
          _
        // Predicated region
        $region21: #{tpu_custom_call.1} parent=11 // pred_check
          %p198 = pneg %p115
        $region22: #{tpu_custom_call.1} parent=11 // pred_check_branch
          %200 = sbr.rel (%p198) target = $region24
        $region23: #{tpu_custom_call.1} parent=11 // pred_region
          %s202 = ssub.s32 2048, 2048
          %203 = vsyncadd [#allocation9], %s202
          %s204 = sshll.u32 [#allocation11], 4
          %s205 = int_to_ptr.vmem [resolvable:$true] %s204
          %210 = dma.hbm_to_vmem [thread:$0]  %s4, 2048, %s205, [#allocation9], 64, 64, 4
        $region24: #{tpu_custom_call.1} parent=11 // pred_fallthru
          _
        // Predicated region
        $region25: #{tpu_custom_call.1} parent=11 // pred_check
          %p211 = pneg %p136
        $region26: #{tpu_custom_call.1} parent=11 // pred_check_branch
          %213 = sbr.rel (%p211) target = $region28
        $region27: #{tpu_custom_call.1} parent=11 // pred_region
          _
        $region28: #{tpu_custom_call.1} parent=11 // pred_fallthru
          _
      $region12: #{tpu_custom_call.1} parent=5 // pred_fallthru
        _
      %p214 = scmp.lt.s32.totalorder %s16, 4
      // Predicated region
      $region29: #{tpu_custom_call.1} parent=5 // pred_check
        %p215 = pneg %p214
      $region30: #{tpu_custom_call.1} parent=5 // pred_check_branch
        %217 = sbr.rel (%p215) target = $region32
      $region31: #{tpu_custom_call.1} parent=5 // pred_region
        // Predicated region
        $region33: #{tpu_custom_call.1} parent=31 // pred_check
          %p218 = pneg %p88
        $region34: #{tpu_custom_call.1} parent=31 // pred_check_branch
          %220 = sbr.rel (%p218) target = $region36
        $region35: #{tpu_custom_call.1} parent=31 // pred_region
          %s221 = sand.u32 %s16, 1
          %s222 = scalar_lea.sflag [#allocation6], %s221
          %s223 = sand.u32 %s78, 1
          %s224 = smul.addr %s223, 256
          %s225 = scalar_lea.vmem [#allocation10], %s224
          %s226 = ssub.s32 %s16, 1
          %p227 = scmp.lt.s32.totalorder %s226, 1
          %s228 = scalar_select %p227, %s226, 1
          %p229 = scmp.gt.s32.totalorder %s228, 0
          %s230 = scalar_select %p229, %s228, 0
          %s232 = ssub.s32 4096, 4096
          %233 = vsyncadd %s222, %s232
          %s234 = smul.addr %s230, 64
          %s235 = smul.addr %s234, 64
          %s236 = scalar_lea.hbm %s3, %s235
          %s237 = sshll.u32 %s225, 4
          %s238 = int_to_ptr.vmem [resolvable:$true] %s237
          %243 = dma.hbm_to_vmem [thread:$0]  %s236, 4096, %s238, %s222, 128, 128, 8
        $region36: #{tpu_custom_call.1} parent=31 // pred_fallthru
          _
      $region32: #{tpu_custom_call.1} parent=5 // pred_fallthru
        _
      %p244 = scmp.le.s32.totalorder 1, %s16
      %p245 = scmp.lt.s32.totalorder %s16, 5
      %p246 = pnand %p244, %p245
      %p247 = pneg %p246
      // Predicated region
      $region37: #{tpu_custom_call.1} parent=5 // pred_check
        _
      $region38: #{tpu_custom_call.1} parent=5 // pred_check_branch
        %249 = sbr.rel (%p246) target = $region40
      $region39: #{tpu_custom_call.1} parent=5 // pred_region
        %s250 = ssub.s32 %s16, 1
        // Predicated region
        $region41: #{tpu_custom_call.1} parent=39 // pred_check
          %p251 = pneg %p37
        $region42: #{tpu_custom_call.1} parent=39 // pred_check_branch
          %253 = sbr.rel (%p251) target = $region44
        $region43: #{tpu_custom_call.1} parent=39 // pred_region
          %254 = dma.done [#allocation6], 256
        $region44: #{tpu_custom_call.1} parent=39 // pred_fallthru
          _
        // Predicated region
        $region45: #{tpu_custom_call.1} parent=39 // pred_check
          %p255 = pneg %p58
        $region46: #{tpu_custom_call.1} parent=39 // pred_check_branch
          %257 = sbr.rel (%p255) target = $region48
        $region47: #{tpu_custom_call.1} parent=39 // pred_region
          %258 = dma.done [#allocation9], 4096
        $region48: #{tpu_custom_call.1} parent=39 // pred_fallthru
          _
        %s259 = sand.u32 %s21, 1
        %s260 = scalar_lea.sflag [#allocation6], %s259
        %s261 = sand.u32 %s81, 1
        %s262 = smul.addr %s261, 256
        %s263 = scalar_lea.vmem [#allocation10], %s262
        // Predicated region
        $region49: #{tpu_custom_call.1} parent=39 // pred_check
          %p264 = pneg %p94
        $region50: #{tpu_custom_call.1} parent=39 // pred_check_branch
          %266 = sbr.rel (%p264) target = $region52
        $region51: #{tpu_custom_call.1} parent=39 // pred_region
          %267 = dma.done %s260, 4096
        $region52: #{tpu_custom_call.1} parent=39 // pred_fallthru
          _
        // Predicated region
        $region53: #{tpu_custom_call.1} parent=39 // pred_check
          %p268 = pneg %p115
        $region54: #{tpu_custom_call.1} parent=39 // pred_check_branch
          %270 = sbr.rel (%p268) target = $region56
        $region55: #{tpu_custom_call.1} parent=39 // pred_region
          %271 = dma.done [#allocation9], 2048
        $region56: #{tpu_custom_call.1} parent=39 // pred_fallthru
          _
        %p272 = pneg %p37
        %p273 = pneg %p34
        %p274 = pneg %p58
        %p275 = pneg %p55
        %s276 = sand.u32 %s21, 1
        %s277 = scalar_lea.sflag [#allocation6], %s276
        %s278 = sand.u32 %s81, 1
        %s279 = smul.addr %s278, 256
        %s280 = scalar_lea.vmem [#allocation10], %s279
        %p281 = pneg %p94
        %p282 = pneg %p91
        %p283 = pneg %p115
        %p284 = pneg %p112
        %p285 = pneg %p136
        %p286 = pneg %p133
        %p287 = pneg %p157
        %p288 = pneg %p154
        %s289 = ssub.s32 %s21, 1
        %p290 = scmp.lt.s32.totalorder %s289, 1
        %s291 = scalar_select %p290, %s289, 1
        %p292 = scmp.gt.s32.totalorder %s291, 0
        %s293 = scalar_select %p292, %s291, 0
        %s295 = sld [smem:[#allocation4]]
        %s296 = scvt.s32.f32 %s295
        %s297 = smul.f32 %s296, 256.0
        %v298 = vstv %s297
        %v299 = vrcp.pop %v298
        %s300 = vtos %v299
        %p301 = scmp.eq.s32.totalorder %s21, 0
        // Predicated region
        $region57: #{tpu_custom_call.1} parent=39 // pred_check
          %p302 = pneg %p301
        $region58: #{tpu_custom_call.1} parent=39 // pred_check_branch
          %304 = sbr.rel (%p302) target = $region60
        $region59: #{tpu_custom_call.1} parent=39 // pred_region
          %v305 = vld [vmem:[#allocation5] sm:$0xff]
          %v306 = vld [vmem:[#allocation5 + $0x8] sm:$0xff]
          %v307 = vld [vmem:[#allocation8] sm:$0xff]
          %v308 = vld [vmem:[#allocation8 + $0x8] sm:$0xff]
          %v309 = vld [vmem:[#allocation8 + $0x10] sm:$0xff]
          %v310 = vld [vmem:[#allocation8 + $0x18] sm:$0xff]
          %v311 = vld [vmem:[#allocation8 + $0x20] sm:$0xff]
          %v312 = vld [vmem:[#allocation8 + $0x28] sm:$0xff]
          %v313 = vld [vmem:[#allocation8 + $0x30] sm:$0xff]
          %v314 = vld [vmem:[#allocation8 + $0x38] sm:$0xff]
          %v315 = vld [vmem:[#allocation8 + $0x40] sm:$0xff]
          %v316 = vld [vmem:[#allocation8 + $0x48] sm:$0xff]
          %v317 = vld [vmem:[#allocation8 + $0x50] sm:$0xff]
          %v318 = vld [vmem:[#allocation8 + $0x58] sm:$0xff]
          %v319 = vld [vmem:[#allocation8 + $0x60] sm:$0xff]
          %v320 = vld [vmem:[#allocation8 + $0x68] sm:$0xff]
          %v321 = vld [vmem:[#allocation8 + $0x70] sm:$0xff]
          %v322 = vld [vmem:[#allocation8 + $0x78] sm:$0xff]
          %v323 = vld [vmem:[#allocation8 + $0x80] sm:$0xff]
          %v324 = vld [vmem:[#allocation8 + $0x88] sm:$0xff]
          %v325 = vld [vmem:[#allocation8 + $0x90] sm:$0xff]
          %v326 = vld [vmem:[#allocation8 + $0x98] sm:$0xff]
          %v327 = vld [vmem:[#allocation8 + $0xa0] sm:$0xff]
          %v328 = vld [vmem:[#allocation8 + $0xa8] sm:$0xff]
          %v329 = vld [vmem:[#allocation8 + $0xb0] sm:$0xff]
          %v330 = vld [vmem:[#allocation8 + $0xb8] sm:$0xff]
          %v331 = vld [vmem:[#allocation8 + $0xc0] sm:$0xff]
          %v332 = vld [vmem:[#allocation8 + $0xc8] sm:$0xff]
          %v333 = vld [vmem:[#allocation8 + $0xd0] sm:$0xff]
          %v334 = vld [vmem:[#allocation8 + $0xd8] sm:$0xff]
          %v335 = vld [vmem:[#allocation8 + $0xe0] sm:$0xff]
          %v336 = vld [vmem:[#allocation8 + $0xe8] sm:$0xff]
          %v337 = vld [vmem:[#allocation8 + $0xf0] sm:$0xff]
          %v338 = vld [vmem:[#allocation8 + $0xf8] sm:$0xff]
          %v341 = vunpack.c.l.b16 %v305
          %v342 = vunpack.c.h.b16 %v305
          %v343 = vunpack.c.l.b16 %v306
          %v344 = vunpack.c.h.b16 %v306
          %v345 = vpack.c.b16 %v343, %v341
          %v346 = vpack.c.b16 %v344, %v342
          %v381 = vunpack.c.l.b16 %v307
          %v382 = vunpack.c.h.b16 %v307
          %v383 = vunpack.c.l.b16 %v308
          %v384 = vunpack.c.h.b16 %v308
          %v385 = vunpack.c.l.b16 %v309
          %v386 = vunpack.c.h.b16 %v309
          %v387 = vunpack.c.l.b16 %v310
          %v388 = vunpack.c.h.b16 %v310
          %v389 = vunpack.c.l.b16 %v311
          %v390 = vunpack.c.h.b16 %v311
          %v391 = vunpack.c.l.b16 %v312
          %v392 = vunpack.c.h.b16 %v312
          %v393 = vunpack.c.l.b16 %v313
          %v394 = vunpack.c.h.b16 %v313
          %v395 = vunpack.c.l.b16 %v314
          %v396 = vunpack.c.h.b16 %v314
          %v397 = vunpack.c.l.b16 %v315
          %v398 = vunpack.c.h.b16 %v315
          %v399 = vunpack.c.l.b16 %v316
          %v400 = vunpack.c.h.b16 %v316
          %v401 = vunpack.c.l.b16 %v317
          %v402 = vunpack.c.h.b16 %v317
          %v403 = vunpack.c.l.b16 %v318
          %v404 = vunpack.c.h.b16 %v318
          %v405 = vunpack.c.l.b16 %v319
          %v406 = vunpack.c.h.b16 %v319
          %v407 = vunpack.c.l.b16 %v320
          %v408 = vunpack.c.h.b16 %v320
          %v409 = vunpack.c.l.b16 %v321
          %v410 = vunpack.c.h.b16 %v321
          %v411 = vunpack.c.l.b16 %v322
          %v412 = vunpack.c.h.b16 %v322
          %v413 = vunpack.c.l.b16 %v323
          %v414 = vunpack.c.h.b16 %v323
          %v415 = vunpack.c.l.b16 %v324
          %v416 = vunpack.c.h.b16 %v324
          %v417 = vunpack.c.l.b16 %v325
          %v418 = vunpack.c.h.b16 %v325
          %v419 = vunpack.c.l.b16 %v326
          %v420 = vunpack.c.h.b16 %v326
          %v421 = vunpack.c.l.b16 %v327
          %v422 = vunpack.c.h.b16 %v327
          %v423 = vunpack.c.l.b16 %v328
          %v424 = vunpack.c.h.b16 %v328
          %v425 = vunpack.c.l.b16 %v329
          %v426 = vunpack.c.h.b16 %v329
          %v427 = vunpack.c.l.b16 %v330
          %v428 = vunpack.c.h.b16 %v330
          %v429 = vunpack.c.l.b16 %v331
          %v430 = vunpack.c.h.b16 %v331
          %v431 = vunpack.c.l.b16 %v332
          %v432 = vunpack.c.h.b16 %v332
          %v433 = vunpack.c.l.b16 %v333
          %v434 = vunpack.c.h.b16 %v333
          %v435 = vunpack.c.l.b16 %v334
          %v436 = vunpack.c.h.b16 %v334
          %v437 = vunpack.c.l.b16 %v335
          %v438 = vunpack.c.h.b16 %v335
          %v439 = vunpack.c.l.b16 %v336
          %v440 = vunpack.c.h.b16 %v336
          %v441 = vunpack.c.l.b16 %v337
          %v442 = vunpack.c.h.b16 %v337
          %v443 = vunpack.c.l.b16 %v338
          %v444 = vunpack.c.h.b16 %v338
          %v445 = vpack.c.b16 %v383, %v381
          %v446 = vpack.c.b16 %v384, %v382
          %v447 = vpack.c.b16 %v387, %v385
          %v448 = vpack.c.b16 %v388, %v386
          %v449 = vpack.c.b16 %v391, %v389
          %v450 = vpack.c.b16 %v392, %v390
          %v451 = vpack.c.b16 %v395, %v393
          %v452 = vpack.c.b16 %v396, %v394
          %v453 = vpack.c.b16 %v399, %v397
          %v454 = vpack.c.b16 %v400, %v398
          %v455 = vpack.c.b16 %v403, %v401
          %v456 = vpack.c.b16 %v404, %v402
          %v457 = vpack.c.b16 %v407, %v405
          %v458 = vpack.c.b16 %v408, %v406
          %v459 = vpack.c.b16 %v411, %v409
          %v460 = vpack.c.b16 %v412, %v410
          %v461 = vpack.c.b16 %v415, %v413
          %v462 = vpack.c.b16 %v416, %v414
          %v463 = vpack.c.b16 %v419, %v417
          %v464 = vpack.c.b16 %v420, %v418
          %v465 = vpack.c.b16 %v423, %v421
          %v466 = vpack.c.b16 %v424, %v422
          %v467 = vpack.c.b16 %v427, %v425
          %v468 = vpack.c.b16 %v428, %v426
          %v469 = vpack.c.b16 %v431, %v429
          %v470 = vpack.c.b16 %v432, %v430
          %v471 = vpack.c.b16 %v435, %v433
          %v472 = vpack.c.b16 %v436, %v434
          %v473 = vpack.c.b16 %v439, %v437
          %v474 = vpack.c.b16 %v440, %v438
          %v475 = vpack.c.b16 %v443, %v441
          %v476 = vpack.c.b16 %v444, %v442
          %509 = vmatprep.subr.bf16.mxu0 %v446
          %510 = vmatpush1.bf16.msra.mxu0 %v445
          %511 = vmatprep.subr.bf16.mxu0 %v448
          %512 = vmatpush1.bf16.msra.mxu0 %v447
          %513 = vmatprep.subr.bf16.mxu0 %v450
          %514 = vmatpush1.bf16.msra.mxu0 %v449
          %515 = vmatprep.subr.bf16.mxu0 %v452
          %516 = vmatpush1.bf16.msra.mxu0 %v451
          %517 = vmatprep.subr.bf16.mxu0 %v454
          %518 = vmatpush1.bf16.msra.mxu0 %v453
          %519 = vmatprep.subr.bf16.mxu0 %v456
          %520 = vmatpush1.bf16.msra.mxu0 %v455
          %521 = vmatprep.subr.bf16.mxu0 %v458
          %522 = vmatpush1.bf16.msra.mxu0 %v457
          %523 = vmatprep.subr.bf16.mxu0 %v460
          %524 = vmatpush1.bf16.msra.mxu0 %v459
          %525 = vmatprep.subr.bf16.mxu0 %v462
          %526 = vmatpush1.bf16.msra.mxu0 %v461
          %527 = vmatprep.subr.bf16.mxu0 %v464
          %528 = vmatpush1.bf16.msra.mxu0 %v463
          %529 = vmatprep.subr.bf16.mxu0 %v466
          %530 = vmatpush1.bf16.msra.mxu0 %v465
          %531 = vmatprep.subr.bf16.mxu0 %v468
          %532 = vmatpush1.bf16.msra.mxu0 %v467
          %533 = vmatprep.subr.bf16.mxu0 %v470
          %534 = vmatpush1.bf16.msra.mxu0 %v469
          %535 = vmatprep.subr.bf16.mxu0 %v472
          %536 = vmatpush1.bf16.msra.mxu0 %v471
          %537 = vmatprep.subr.bf16.mxu0 %v474
          %538 = vmatpush1.bf16.msra.mxu0 %v473
          %539 = vmatprep.subr.bf16.mxu0 %v476
          %540 = vmatpush1.bf16.msra.mxu0 %v475
          %541 = vmatprep.mubr.bf16.mxu0 %v346
          %542 = vmatmul.mubr.bf16.gmra.mrb[0].mxu0 %v345
          %v543 = vpop.f32.mrb[0].mxu0
          %v544 = vadd.f32 0.0, %v543
          %v545 = vpop.f32.mrb[0].mxu0
          %v546 = vadd.f32 0.0, %v545
          %v547 = vpop.f32.mrb[0].mxu0
          %v548 = vadd.f32 0.0, %v547
          %v549 = vpop.f32.mrb[0].mxu0
          %v550 = vadd.f32 0.0, %v549
          %551 = vdwg.mxu0
          %v552 = vadd.f32 %v544, %v548
          %v553 = vrot.slane %v552, 4
          %v554 = vadd.f32 %v552, %v553
          %v555 = vrot.slane %v554, 2
          %v556 = vadd.f32 %v554, %v555
          %v557 = vrot.slane %v556, 1
          %v558 = vadd.f32 %v556, %v557
          %v559 = vadd.f32 %v546, %v550
          %v560 = vrot.slane %v559, 4
          %v561 = vadd.f32 %v559, %v560
          %v562 = vrot.slane %v561, 2
          %v563 = vadd.f32 %v561, %v562
          %v564 = vrot.slane %v563, 1
          %v565 = vadd.f32 %v563, %v564
          %v566 = vmul.f32 %v544, %v544
          %v567 = vmul.f32 %v546, %v546
          %v568 = vmul.f32 %v548, %v548
          %v569 = vmul.f32 %v550, %v550
          %v570 = vadd.f32 %v566, %v568
          %v571 = vrot.slane %v570, 4
          %v572 = vadd.f32 %v570, %v571
          %v573 = vrot.slane %v572, 2
          %v574 = vadd.f32 %v572, %v573
          %v575 = vrot.slane %v574, 1
          %v576 = vadd.f32 %v574, %v575
          %v577 = vadd.f32 %v567, %v569
          %v578 = vrot.slane %v577, 4
          %v579 = vadd.f32 %v577, %v578
          %v580 = vrot.slane %v579, 2
          %v581 = vadd.f32 %v579, %v580
          %v582 = vrot.slane %v581, 1
          %v583 = vadd.f32 %v581, %v582
          %vm584 = vcmask 1040384
          %v585 = vsel %vm584, %v558, %v576
          %v586 = vsel %vm584, %v565, %v583
          %vm587 = vcmask 1041408
          %v588 = vsel %vm587, %v585, 0.0
          %v589 = vsel %vm587, %v586, 0.0
          %v590 = vadd.f32 %v588, %v589
          %591 = vadd.xlane.f32.xlu0 %v590
          %v592 = vpop.xlane.xlu0 %591
          %v593 = vstv %s300
          %v594 = vmul.f32 %v592, %v593
          %v595 = vmul.f32 %v594, %v594
          %v597 = vrot.slane %v595, 7
          %v599 = vsub.f32 %v594, %v597
          %v600 = vlaneseq
          %v601 = vshrl.u32 %v600, 7
          %v602 = vsub.s32 0, %v601
          %v603 = vrot.slane %v594, %v602
          %v604 = vsub.f32 %v544, %v603
          %v605 = vsub.f32 %v546, %v603
          %v606 = vsub.f32 %v548, %v603
          %v607 = vsub.f32 %v550, %v603
          %v608 = vadd.f32 %v599, 1e-05
          %v609 = vrsqrt.pop %v608
          %v611 = vrot.slane %v609, 1
          %s612 = vtos %v611
          %v613 = vstv %s612
          %v615 = vmul.f32 %v604, %v613
          %v616 = vmul.f32 %v605, %v613
          %v617 = vmul.f32 %v606, %v613
          %v618 = vmul.f32 %v607, %v613
          %v619 = vtanh.pop %v615
          %v620 = vtanh.pop %v616
          %v621 = vtanh.pop %v617
          %v622 = vtanh.pop %v618
          %v623 = vlaneseq
          %v624 = vshrl.u32 %v623, 7
          %v625 = vadd.s32 %v624, 8
          %v626 = vstv %s295
          %vm627 = vcmp.lt.s32.totalorder %v624, %v626
          %vm628 = vcmp.lt.s32.totalorder %v625, %v626
          %v629 = vsel %vm627, 1, 0
          %v630 = vsel %vm628, 1, 0
          %v631 = vcvt.s32.f32 %v629
          %v632 = vcvt.s32.f32 %v630
          %v633 = vmul.f32 %v619, %v631
          %v634 = vmul.f32 %v620, %v631
          %v635 = vmul.f32 %v621, %v632
          %v636 = vmul.f32 %v622, %v632
          %637 = vst [vmem:[#allocation2] sm:$0xff] %v633
          %638 = vst [vmem:[#allocation2 + $0x8] sm:$0xff] %v634
          %639 = vst [vmem:[#allocation2 + $0x10] sm:$0xff] %v635
          %640 = vst [vmem:[#allocation2 + $0x18] sm:$0xff] %v636
        $region60: #{tpu_custom_call.1} parent=39 // pred_fallthru
          _
        %p641 = scmp.gt.s32.totalorder %s21, 0
        %p642 = scmp.lt.s32.totalorder %s21, 3
        %p643 = pnand %p641, %p642
        %p644 = pneg %p643
        // Predicated region
        $region61: #{tpu_custom_call.1} parent=39 // pred_check
          _
        $region62: #{tpu_custom_call.1} parent=39 // pred_check_branch
          %646 = sbr.rel (%p643) target = $region64
        $region63: #{tpu_custom_call.1} parent=39 // pred_region
          %v647 = vld [vmem:[#allocation2] sm:$0xff]
          %v648 = vld [vmem:[#allocation2 + $0x8] sm:$0xff]
          %v649 = vld [vmem:[#allocation2 + $0x10] sm:$0xff]
          %v650 = vld [vmem:[#allocation2 + $0x18] sm:$0xff]
          %v651 = vpack.c.bf16 %v649, %v647
          %v652 = vpack.c.bf16 %v650, %v648
          %v653 = vld [vmem:[%s263] sm:$0xff]
          %v654 = vld [vmem:[%s263 + $0x8] sm:$0xff]
          %v655 = vld [vmem:[%s263 + $0x10] sm:$0xff]
          %v656 = vld [vmem:[%s263 + $0x18] sm:$0xff]
          %v657 = vld [vmem:[%s263 + $0x20] sm:$0xff]
          %v658 = vld [vmem:[%s263 + $0x28] sm:$0xff]
          %v659 = vld [vmem:[%s263 + $0x30] sm:$0xff]
          %v660 = vld [vmem:[%s263 + $0x38] sm:$0xff]
          %v661 = vld [vmem:[%s263 + $0x40] sm:$0xff]
          %v662 = vld [vmem:[%s263 + $0x48] sm:$0xff]
          %v663 = vld [vmem:[%s263 + $0x50] sm:$0xff]
          %v664 = vld [vmem:[%s263 + $0x58] sm:$0xff]
          %v665 = vld [vmem:[%s263 + $0x60] sm:$0xff]
          %v666 = vld [vmem:[%s263 + $0x68] sm:$0xff]
          %v667 = vld [vmem:[%s263 + $0x70] sm:$0xff]
          %v668 = vld [vmem:[%s263 + $0x78] sm:$0xff]
          %v669 = vld [vmem:[%s263 + $0x80] sm:$0xff]
          %v670 = vld [vmem:[%s263 + $0x88] sm:$0xff]
          %v671 = vld [vmem:[%s263 + $0x90] sm:$0xff]
          %v672 = vld [vmem:[%s263 + $0x98] sm:$0xff]
          %v673 = vld [vmem:[%s263 + $0xa0] sm:$0xff]
          %v674 = vld [vmem:[%s263 + $0xa8] sm:$0xff]
          %v675 = vld [vmem:[%s263 + $0xb0] sm:$0xff]
          %v676 = vld [vmem:[%s263 + $0xb8] sm:$0xff]
          %v677 = vld [vmem:[%s263 + $0xc0] sm:$0xff]
          %v678 = vld [vmem:[%s263 + $0xc8] sm:$0xff]
          %v679 = vld [vmem:[%s263 + $0xd0] sm:$0xff]
          %v680 = vld [vmem:[%s263 + $0xd8] sm:$0xff]
          %v681 = vld [vmem:[%s263 + $0xe0] sm:$0xff]
          %v682 = vld [vmem:[%s263 + $0xe8] sm:$0xff]
          %v683 = vld [vmem:[%s263 + $0xf0] sm:$0xff]
          %v684 = vld [vmem:[%s263 + $0xf8] sm:$0xff]
          %v717 = vunpack.c.l.b16 %v653
          %v718 = vunpack.c.h.b16 %v653
          %v719 = vunpack.c.l.b16 %v654
          %v720 = vunpack.c.h.b16 %v654
          %v721 = vunpack.c.l.b16 %v655
          %v722 = vunpack.c.h.b16 %v655
          %v723 = vunpack.c.l.b16 %v656
          %v724 = vunpack.c.h.b16 %v656
          %v725 = vunpack.c.l.b16 %v657
          %v726 = vunpack.c.h.b16 %v657
          %v727 = vunpack.c.l.b16 %v658
          %v728 = vunpack.c.h.b16 %v658
          %v729 = vunpack.c.l.b16 %v659
          %v730 = vunpack.c.h.b16 %v659
          %v731 = vunpack.c.l.b16 %v660
          %v732 = vunpack.c.h.b16 %v660
          %v733 = vunpack.c.l.b16 %v661
          %v734 = vunpack.c.h.b16 %v661
          %v735 = vunpack.c.l.b16 %v662
          %v736 = vunpack.c.h.b16 %v662
          %v737 = vunpack.c.l.b16 %v663
          %v738 = vunpack.c.h.b16 %v663
          %v739 = vunpack.c.l.b16 %v664
          %v740 = vunpack.c.h.b16 %v664
          %v741 = vunpack.c.l.b16 %v665
          %v742 = vunpack.c.h.b16 %v665
          %v743 = vunpack.c.l.b16 %v666
          %v744 = vunpack.c.h.b16 %v666
          %v745 = vunpack.c.l.b16 %v667
          %v746 = vunpack.c.h.b16 %v667
          %v747 = vunpack.c.l.b16 %v668
          %v748 = vunpack.c.h.b16 %v668
          %v749 = vunpack.c.l.b16 %v669
          %v750 = vunpack.c.h.b16 %v669
          %v751 = vunpack.c.l.b16 %v670
          %v752 = vunpack.c.h.b16 %v670
          %v753 = vunpack.c.l.b16 %v671
          %v754 = vunpack.c.h.b16 %v671
          %v755 = vunpack.c.l.b16 %v672
          %v756 = vunpack.c.h.b16 %v672
          %v757 = vunpack.c.l.b16 %v673
          %v758 = vunpack.c.h.b16 %v673
          %v759 = vunpack.c.l.b16 %v674
          %v760 = vunpack.c.h.b16 %v674
          %v761 = vunpack.c.l.b16 %v675
          %v762 = vunpack.c.h.b16 %v675
          %v763 = vunpack.c.l.b16 %v676
          %v764 = vunpack.c.h.b16 %v676
          %v765 = vunpack.c.l.b16 %v677
          %v766 = vunpack.c.h.b16 %v677
          %v767 = vunpack.c.l.b16 %v678
          %v768 = vunpack.c.h.b16 %v678
          %v769 = vunpack.c.l.b16 %v679
          %v770 = vunpack.c.h.b16 %v679
          %v771 = vunpack.c.l.b16 %v680
          %v772 = vunpack.c.h.b16 %v680
          %v773 = vunpack.c.l.b16 %v681
          %v774 = vunpack.c.h.b16 %v681
          %v775 = vunpack.c.l.b16 %v682
          %v776 = vunpack.c.h.b16 %v682
          %v777 = vunpack.c.l.b16 %v683
          %v778 = vunpack.c.h.b16 %v683
          %v779 = vunpack.c.l.b16 %v684
          %v780 = vunpack.c.h.b16 %v684
          %v781 = vpack.c.b16 %v719, %v717
          %v782 = vpack.c.b16 %v720, %v718
          %v783 = vpack.c.b16 %v723, %v721
          %v784 = vpack.c.b16 %v724, %v722
          %v785 = vpack.c.b16 %v727, %v725
          %v786 = vpack.c.b16 %v728, %v726
          %v787 = vpack.c.b16 %v731, %v729
          %v788 = vpack.c.b16 %v732, %v730
          %v789 = vpack.c.b16 %v735, %v733
          %v790 = vpack.c.b16 %v736, %v734
          %v791 = vpack.c.b16 %v739, %v737
          %v792 = vpack.c.b16 %v740, %v738
          %v793 = vpack.c.b16 %v743, %v741
          %v794 = vpack.c.b16 %v744, %v742
          %v795 = vpack.c.b16 %v747, %v745
          %v796 = vpack.c.b16 %v748, %v746
          %v797 = vpack.c.b16 %v751, %v749
          %v798 = vpack.c.b16 %v752, %v750
          %v799 = vpack.c.b16 %v755, %v753
          %v800 = vpack.c.b16 %v756, %v754
          %v801 = vpack.c.b16 %v759, %v757
          %v802 = vpack.c.b16 %v760, %v758
          %v803 = vpack.c.b16 %v763, %v761
          %v804 = vpack.c.b16 %v764, %v762
          %v805 = vpack.c.b16 %v767, %v765
          %v806 = vpack.c.b16 %v768, %v766
          %v807 = vpack.c.b16 %v771, %v769
          %v808 = vpack.c.b16 %v772, %v770
          %v809 = vpack.c.b16 %v775, %v773
          %v810 = vpack.c.b16 %v776, %v774
          %v811 = vpack.c.b16 %v779, %v777
          %v812 = vpack.c.b16 %v780, %v778
          %845 = vmatprep.subr.bf16.mxu0 %v782
          %846 = vmatpush1.bf16.msra.mxu0 %v781
          %847 = vmatprep.subr.bf16.mxu0 %v784
          %848 = vmatpush1.bf16.msra.mxu0 %v783
          %849 = vmatprep.subr.bf16.mxu0 %v786
          %850 = vmatpush1.bf16.msra.mxu0 %v785
          %851 = vmatprep.subr.bf16.mxu0 %v788
          %852 = vmatpush1.bf16.msra.mxu0 %v787
          %853 = vmatprep.subr.bf16.mxu0 %v790
          %854 = vmatpush1.bf16.msra.mxu0 %v789
          %855 = vmatprep.subr.bf16.mxu0 %v792
          %856 = vmatpush1.bf16.msra.mxu0 %v791
          %857 = vmatprep.subr.bf16.mxu0 %v794
          %858 = vmatpush1.bf16.msra.mxu0 %v793
          %859 = vmatprep.subr.bf16.mxu0 %v796
          %860 = vmatpush1.bf16.msra.mxu0 %v795
          %861 = vmatprep.subr.bf16.mxu0 %v798
          %862 = vmatpush1.bf16.msra.mxu0 %v797
          %863 = vmatprep.subr.bf16.mxu0 %v800
          %864 = vmatpush1.bf16.msra.mxu0 %v799
          %865 = vmatprep.subr.bf16.mxu0 %v802
          %866 = vmatpush1.bf16.msra.mxu0 %v801
          %867 = vmatprep.subr.bf16.mxu0 %v804
          %868 = vmatpush1.bf16.msra.mxu0 %v803
          %869 = vmatprep.subr.bf16.mxu0 %v806
          %870 = vmatpush1.bf16.msra.mxu0 %v805
          %871 = vmatprep.subr.bf16.mxu0 %v808
          %872 = vmatpush1.bf16.msra.mxu0 %v807
          %873 = vmatprep.subr.bf16.mxu0 %v810
          %874 = vmatpush1.bf16.msra.mxu0 %v809
          %875 = vmatprep.subr.bf16.mxu0 %v812
          %876 = vmatpush1.bf16.msra.mxu0 %v811
          %877 = vmatprep.mubr.bf16.mxu0 %v652
          %878 = vmatmul.mubr.bf16.gmra.mrb[0].mxu0 %v651
          %v879 = vpop.f32.mrb[0].mxu0
          %v880 = vadd.f32 0.0, %v879
          %v881 = vpop.f32.mrb[0].mxu0
          %v882 = vadd.f32 0.0, %v881
          %v883 = vpop.f32.mrb[0].mxu0
          %v884 = vadd.f32 0.0, %v883
          %v885 = vpop.f32.mrb[0].mxu0
          %v886 = vadd.f32 0.0, %v885
          %887 = vdwg.mxu0
          %v888 = vadd.f32 %v880, %v884
          %v889 = vrot.slane %v888, 4
          %v890 = vadd.f32 %v888, %v889
          %v891 = vrot.slane %v890, 2
          %v892 = vadd.f32 %v890, %v891
          %v893 = vrot.slane %v892, 1
          %v894 = vadd.f32 %v892, %v893
          %v895 = vadd.f32 %v882, %v886
          %v896 = vrot.slane %v895, 4
          %v897 = vadd.f32 %v895, %v896
          %v898 = vrot.slane %v897, 2
          %v899 = vadd.f32 %v897, %v898
          %v900 = vrot.slane %v899, 1
          %v901 = vadd.f32 %v899, %v900
          %v902 = vmul.f32 %v880, %v880
          %v903 = vmul.f32 %v882, %v882
          %v904 = vmul.f32 %v884, %v884
          %v905 = vmul.f32 %v886, %v886
          %v906 = vadd.f32 %v902, %v904
          %v907 = vrot.slane %v906, 4
          %v908 = vadd.f32 %v906, %v907
          %v909 = vrot.slane %v908, 2
          %v910 = vadd.f32 %v908, %v909
          %v911 = vrot.slane %v910, 1
          %v912 = vadd.f32 %v910, %v911
          %v913 = vadd.f32 %v903, %v905
          %v914 = vrot.slane %v913, 4
          %v915 = vadd.f32 %v913, %v914
          %v916 = vrot.slane %v915, 2
          %v917 = vadd.f32 %v915, %v916
          %v918 = vrot.slane %v917, 1
          %v919 = vadd.f32 %v917, %v918
          %vm920 = vcmask 1040384
          %v921 = vsel %vm920, %v894, %v912
          %v922 = vsel %vm920, %v901, %v919
          %vm923 = vcmask 1041408
          %v924 = vsel %vm923, %v921, 0.0
          %v925 = vsel %vm923, %v922, 0.0
          %v926 = vadd.f32 %v924, %v925
          %927 = vadd.xlane.f32.xlu0 %v926
          %v928 = vpop.xlane.xlu0 %927
          %v929 = vstv %s300
          %v930 = vmul.f32 %v928, %v929
          %v931 = vmul.f32 %v930, %v930
          %v933 = vrot.slane %v931, 7
          %v935 = vsub.f32 %v930, %v933
          %v936 = vlaneseq
          %v937 = vshrl.u32 %v936, 7
          %v938 = vsub.s32 0, %v937
          %v939 = vrot.slane %v930, %v938
          %v940 = vsub.f32 %v880, %v939
          %v941 = vsub.f32 %v882, %v939
          %v942 = vsub.f32 %v884, %v939
          %v943 = vsub.f32 %v886, %v939
          %v944 = vadd.f32 %v935, 1e-05
          %v945 = vrsqrt.pop %v944
          %v947 = vrot.slane %v945, 1
          %s948 = vtos %v947
          %v949 = vstv %s948
          %v951 = vmul.f32 %v940, %v949
          %v952 = vmul.f32 %v941, %v949
          %v953 = vmul.f32 %v942, %v949
          %v954 = vmul.f32 %v943, %v949
          %v955 = vtanh.pop %v951
          %v956 = vtanh.pop %v952
          %v957 = vtanh.pop %v953
          %v958 = vtanh.pop %v954
          %v959 = vlaneseq
          %v960 = vshrl.u32 %v959, 7
          %v961 = vadd.s32 %v960, 8
          %v962 = vstv %s295
          %vm963 = vcmp.lt.s32.totalorder %v960, %v962
          %vm964 = vcmp.lt.s32.totalorder %v961, %v962
          %v965 = vsel %vm963, 1, 0
          %v966 = vsel %vm964, 1, 0
          %v967 = vcvt.s32.f32 %v965
          %v968 = vcvt.s32.f32 %v966
          %v969 = vmul.f32 %v955, %v967
          %v970 = vmul.f32 %v956, %v967
          %v971 = vmul.f32 %v957, %v968
          %v972 = vmul.f32 %v958, %v968
          %973 = vst [vmem:[#allocation2] sm:$0xff] %v969
          %974 = vst [vmem:[#allocation2 + $0x8] sm:$0xff] %v970
          %975 = vst [vmem:[#allocation2 + $0x10] sm:$0xff] %v971
          %976 = vst [vmem:[#allocation2 + $0x18] sm:$0xff] %v972
        $region64: #{tpu_custom_call.1} parent=39 // pred_fallthru
          _
        %p977 = scmp.eq.s32.totalorder %s21, 3
        // Predicated region
        $region65: #{tpu_custom_call.1} parent=39 // pred_check
          %p978 = pneg %p977
        $region66: #{tpu_custom_call.1} parent=39 // pred_check_branch
          %980 = sbr.rel (%p978) target = $region68
        $region67: #{tpu_custom_call.1} parent=39 // pred_region
          %v981 = vld [vmem:[#allocation2] sm:$0xff]
          %v982 = vld [vmem:[#allocation2 + $0x8] sm:$0xff]
          %v983 = vld [vmem:[#allocation2 + $0x10] sm:$0xff]
          %v984 = vld [vmem:[#allocation2 + $0x18] sm:$0xff]
          %v985 = vpack.c.bf16 %v983, %v981
          %v986 = vpack.c.bf16 %v984, %v982
          %v987 = vld [vmem:[#allocation11] sm:$0xf]
          %v988 = vld [vmem:[#allocation11 + $0x4] sm:$0xf]
          %v989 = vld [vmem:[#allocation11 + $0x8] sm:$0xf]
          %v990 = vld [vmem:[#allocation11 + $0xc] sm:$0xf]
          %v991 = vld [vmem:[#allocation11 + $0x10] sm:$0xf]
          %v992 = vld [vmem:[#allocation11 + $0x14] sm:$0xf]
          %v993 = vld [vmem:[#allocation11 + $0x18] sm:$0xf]
          %v994 = vld [vmem:[#allocation11 + $0x1c] sm:$0xf]
          %v995 = vld [vmem:[#allocation11 + $0x20] sm:$0xf]
          %v996 = vld [vmem:[#allocation11 + $0x24] sm:$0xf]
          %v997 = vld [vmem:[#allocation11 + $0x28] sm:$0xf]
          %v998 = vld [vmem:[#allocation11 + $0x2c] sm:$0xf]
          %v999 = vld [vmem:[#allocation11 + $0x30] sm:$0xf]
          %v1000 = vld [vmem:[#allocation11 + $0x34] sm:$0xf]
          %v1001 = vld [vmem:[#allocation11 + $0x38] sm:$0xf]
          %v1002 = vld [vmem:[#allocation11 + $0x3c] sm:$0xf]
          %v1003 = vld [vmem:[#allocation11 + $0x40] sm:$0xf]
          %v1004 = vld [vmem:[#allocation11 + $0x44] sm:$0xf]
          %v1005 = vld [vmem:[#allocation11 + $0x48] sm:$0xf]
          %v1006 = vld [vmem:[#allocation11 + $0x4c] sm:$0xf]
          %v1007 = vld [vmem:[#allocation11 + $0x50] sm:$0xf]
          %v1008 = vld [vmem:[#allocation11 + $0x54] sm:$0xf]
          %v1009 = vld [vmem:[#allocation11 + $0x58] sm:$0xf]
          %v1010 = vld [vmem:[#allocation11 + $0x5c] sm:$0xf]
          %v1011 = vld [vmem:[#allocation11 + $0x60] sm:$0xf]
          %v1012 = vld [vmem:[#allocation11 + $0x64] sm:$0xf]
          %v1013 = vld [vmem:[#allocation11 + $0x68] sm:$0xf]
          %v1014 = vld [vmem:[#allocation11 + $0x6c] sm:$0xf]
          %v1015 = vld [vmem:[#allocation11 + $0x70] sm:$0xf]
          %v1016 = vld [vmem:[#allocation11 + $0x74] sm:$0xf]
          %v1017 = vld [vmem:[#allocation11 + $0x78] sm:$0xf]
          %v1018 = vld [vmem:[#allocation11 + $0x7c] sm:$0xf]
          %v1019 = vld [vmem:[%s5] sm:$0x1]
          %v1021 = vlaneseq
          %v1022 = vshrl.u32 %v1021, 7
          %v1023 = vsub.s32 0, %v1022
          %v1024 = vrot.slane %v1019, %v1023
          %v1058 = vunpack.c.l.b16 %v987
          %v1059 = vunpack.c.l.b16 %v988
          %v1060 = vunpack.c.l.b16 %v989
          %v1061 = vunpack.c.l.b16 %v990
          %v1062 = vunpack.c.l.b16 %v991
          %v1063 = vunpack.c.l.b16 %v992
          %v1064 = vunpack.c.l.b16 %v993
          %v1065 = vunpack.c.l.b16 %v994
          %v1066 = vunpack.c.l.b16 %v995
          %v1067 = vunpack.c.l.b16 %v996
          %v1068 = vunpack.c.l.b16 %v997
          %v1069 = vunpack.c.l.b16 %v998
          %v1070 = vunpack.c.l.b16 %v999
          %v1071 = vunpack.c.l.b16 %v1000
          %v1072 = vunpack.c.l.b16 %v1001
          %v1073 = vunpack.c.l.b16 %v1002
          %v1074 = vunpack.c.l.b16 %v1003
          %v1075 = vunpack.c.l.b16 %v1004
          %v1076 = vunpack.c.l.b16 %v1005
          %v1077 = vunpack.c.l.b16 %v1006
          %v1078 = vunpack.c.l.b16 %v1007
          %v1079 = vunpack.c.l.b16 %v1008
          %v1080 = vunpack.c.l.b16 %v1009
          %v1081 = vunpack.c.l.b16 %v1010
          %v1082 = vunpack.c.l.b16 %v1011
          %v1083 = vunpack.c.l.b16 %v1012
          %v1084 = vunpack.c.l.b16 %v1013
          %v1085 = vunpack.c.l.b16 %v1014
          %v1086 = vunpack.c.l.b16 %v1015
          %v1087 = vunpack.c.l.b16 %v1016
          %v1088 = vunpack.c.l.b16 %v1017
          %v1089 = vunpack.c.l.b16 %v1018
          %v1090 = vpack.c.b16 %v1059, %v1058
          %v1091 = vpack.c.b16 %v1061, %v1060
          %v1092 = vpack.c.b16 %v1063, %v1062
          %v1093 = vpack.c.b16 %v1065, %v1064
          %v1094 = vpack.c.b16 %v1067, %v1066
          %v1095 = vpack.c.b16 %v1069, %v1068
          %v1096 = vpack.c.b16 %v1071, %v1070
          %v1097 = vpack.c.b16 %v1073, %v1072
          %v1098 = vpack.c.b16 %v1075, %v1074
          %v1099 = vpack.c.b16 %v1077, %v1076
          %v1100 = vpack.c.b16 %v1079, %v1078
          %v1101 = vpack.c.b16 %v1081, %v1080
          %v1102 = vpack.c.b16 %v1083, %v1082
          %v1103 = vpack.c.b16 %v1085, %v1084
          %v1104 = vpack.c.b16 %v1087, %v1086
          %v1105 = vpack.c.b16 %v1089, %v1088
          %1122 = vmatprep.subr.bf16.mxu0 0
          %1123 = vmatpush1.bf16.msra.mxu0 %v1090
          %1124 = vmatprep.subr.bf16.mxu0 0
          %1125 = vmatpush1.bf16.msra.mxu0 %v1091
          %1126 = vmatprep.subr.bf16.mxu0 0
          %1127 = vmatpush1.bf16.msra.mxu0 %v1092
          %1128 = vmatprep.subr.bf16.mxu0 0
          %1129 = vmatpush1.bf16.msra.mxu0 %v1093
          %1130 = vmatprep.subr.bf16.mxu0 0
          %1131 = vmatpush1.bf16.msra.mxu0 %v1094
          %1132 = vmatprep.subr.bf16.mxu0 0
          %1133 = vmatpush1.bf16.msra.mxu0 %v1095
          %1134 = vmatprep.subr.bf16.mxu0 0
          %1135 = vmatpush1.bf16.msra.mxu0 %v1096
          %1136 = vmatprep.subr.bf16.mxu0 0
          %1137 = vmatpush1.bf16.msra.mxu0 %v1097
          %1138 = vmatprep.subr.bf16.mxu0 0
          %1139 = vmatpush1.bf16.msra.mxu0 %v1098
          %1140 = vmatprep.subr.bf16.mxu0 0
          %1141 = vmatpush1.bf16.msra.mxu0 %v1099
          %1142 = vmatprep.subr.bf16.mxu0 0
          %1143 = vmatpush1.bf16.msra.mxu0 %v1100
          %1144 = vmatprep.subr.bf16.mxu0 0
          %1145 = vmatpush1.bf16.msra.mxu0 %v1101
          %1146 = vmatprep.subr.bf16.mxu0 0
          %1147 = vmatpush1.bf16.msra.mxu0 %v1102
          %1148 = vmatprep.subr.bf16.mxu0 0
          %1149 = vmatpush1.bf16.msra.mxu0 %v1103
          %1150 = vmatprep.subr.bf16.mxu0 0
          %1151 = vmatpush1.bf16.msra.mxu0 %v1104
          %1152 = vmatprep.subr.bf16.mxu0 0
          %1153 = vmatpush1.bf16.msra.mxu0 %v1105
          %1154 = vmatprep.mubr.bf16.mxu0 %v986
          %1155 = vmatmul.mubr.bf16.gmra.mrb[0].mxu0 %v985
          %v1156 = vpop.f32.mrb[0].mxu0
          %v1157 = vadd.f32 %v1024, %v1156
          %v1158 = vpop.f32.mrb[0].mxu0
          %v1159 = vpop.f32.mrb[0].mxu0
          %v1160 = vadd.f32 %v1024, %v1159
          %v1161 = vpop.f32.mrb[0].mxu0
          %1162 = vdwg.mxu0
          %1163 = vst [vmem:[#allocation12] sm:$0xff] %v1157
          %1164 = vst [vmem:[#allocation12 + $0x8] sm:$0xff] %v1160
        $region68: #{tpu_custom_call.1} parent=39 // pred_fallthru
          _
        // Predicated region
        $region69: #{tpu_custom_call.1} parent=39 // pred_check
          %p1165 = pneg %p154
        $region70: #{tpu_custom_call.1} parent=39 // pred_check_branch
          %1167 = sbr.rel (%p1165) target = $region72
        $region71: #{tpu_custom_call.1} parent=39 // pred_region
          %s1169 = ssub.s32 256, 256
          %1170 = vsyncadd [#allocation7], %s1169
          %s1171 = sshll.u32 [#allocation12], 4
          %s1172 = int_to_ptr.vmem [resolvable:$true] %s1171
          %1177 = dma.vmem_to_hbm [thread:$0]  %s1172, 256, %s6, [#allocation7], 128, 128, 8
        $region72: #{tpu_custom_call.1} parent=39 // pred_fallthru
          _
        // Predicated region
        $region73: #{tpu_custom_call.1} parent=39 // pred_check
          %p1178 = pneg %p154
        $region74: #{tpu_custom_call.1} parent=39 // pred_check_branch
          %1180 = sbr.rel (%p1178) target = $region76
        $region75: #{tpu_custom_call.1} parent=39 // pred_region
          %1181 = dma.done [#allocation7], 256
        $region76: #{tpu_custom_call.1} parent=39 // pred_fallthru
          _
      $region40: #{tpu_custom_call.1} parent=5 // pred_fallthru
        _
      %p1182 = scmp.le.s32.totalorder 2, %s16
      // Predicated region
      $region77: #{tpu_custom_call.1} parent=5 // pred_check
        %p1183 = pneg %p1182
      $region78: #{tpu_custom_call.1} parent=5 // pred_check_branch
        %1185 = sbr.rel (%p1183) target = $region80
      $region79: #{tpu_custom_call.1} parent=5 // pred_region
        %s1186 = ssub.s32 %s16, 2
      $region80: #{tpu_custom_call.1} parent=5 // pred_fallthru
        _
    $region6: #{tpu_custom_call.1} parent=1 // loop_footer
      %s20 = sadd.s32 1, %s16
    $region7: #{tpu_custom_call.1} parent=1 // loop_footer_branch
      %15 = sbr.rel target = $region3
    $region8: #{tpu_custom_call.1} parent=1 // loop_exit
      _
    %1187 = vsyncpa [#allocation6], 1
    %s1188 = scalar_lea.sflag [#allocation6], 1
    %1189 = vsyncpa %s1188, 1
    %1190 = vsyncpa [#allocation9], 1
    %1191 = vsyncpa [#allocation7], 1
    %s1192 = scalar_lea.sflag [#allocation7], 1
    %1193 = vsyncpa %s1192, 1

</llo_original>
